<compile_context>
chip_gen: v6e
topology: v6e:2x2x1
jax: 0.10.0
libtpu: 0.0.40
codegen_flags: <defaults>
</compile_context>

<pallas_src>
import functools

import jax
import jax.numpy as jnp
from jax import lax
from jax.experimental import pallas as pl
from jax.experimental.pallas import tpu as pltpu

IGNORE_INDEX = 255

# TODO(synk): optional per-class `weight` vector of nn.CrossEntropyLoss is not
# implemented (the module uses the default weight=None).


def _detect_vmem_per_core_bytes():
    """Per-TensorCore VMEM: 128 MiB on v4/v5/v6; 64 MiB conservative default (v7x)."""
    mib = 1024 * 1024
    kind = ""
    try:
        kind = jax.devices()[0].device_kind.lower()
    except Exception:
        pass
    if any(tag in kind for tag in ("v4", "v5", "v6")):
        return 128 * mib
    return 64 * mib


_VMEM_PER_CORE_BYTES = _detect_vmem_per_core_bytes()


def _ce_psp_kernel(logits_ref, tgt_ref, out_ref, *, hw, tile_p, ignore_index):
    # logits_ref: (1, C, TILE_P) source dtype (classes on sublanes, pixels on lanes)
    # tgt_ref:    (1, 1, TILE_P) int32
    # out_ref:    (1, 1, 2, 128) f32; sublane 0 = partial loss sum, sublane 1 = count
    j = pl.program_id(1)

    x = logits_ref[0].astype(jnp.float32)        # (C, TILE_P)
    t = tgt_ref[0]                               # (1, TILE_P)

    # valid pixel: inside the real H*W extent (ragged last tile) and not ignore_index
    pix = j * tile_p + lax.broadcasted_iota(jnp.int32, t.shape, 1)
    mask = (pix < hw) & (t != ignore_index)      # (1, TILE_P) bool

    # numerically stable logsumexp over the class (sublane) axis
    m = jnp.max(x, axis=0, keepdims=True)                                   # (1, TILE_P)
    lse = m + jnp.log(jnp.sum(jnp.exp(x - m), axis=0, keepdims=True))       # (1, TILE_P)

    # pick logits[target] via where-select + sublane sum (no unsupported gather,
    # no 0*inf -> NaN); OOB/garbage lanes are discarded by `mask` below.
    cls = lax.broadcasted_iota(jnp.int32, x.shape, 0)                       # (C, TILE_P)
    picked = jnp.sum(jnp.where(cls == t, x, 0.0), axis=0, keepdims=True)    # (1, TILE_P)

    loss = jnp.where(mask, lse - picked, 0.0)                               # (1, TILE_P)
    valid = mask.astype(jnp.float32)

    # single lane-dense output tile: row 0 = block loss-sum, row 1 = block valid count
    s = jnp.sum(loss, axis=-1, keepdims=True)                               # (1, 1)
    c = jnp.sum(valid, axis=-1, keepdims=True)                              # (1, 1)
    rows = lax.broadcasted_iota(jnp.int32, (2, 128), 0)
    out_ref[...] = jnp.where(rows == 0, s, c).reshape(1, 1, 2, 128)


def _choose_tile_p(n_classes, hw, itemsize, n_batch, vmem_bytes):
    """Largest pixel tile (multiple of 128) such that the double-buffered input blocks
    plus the kernel's (C_pad, TILE_P)-sized temporaries fit in ~70% of per-core VMEM."""
    c_pad = ((n_classes + 7) // 8) * 8            # class dim padded to 8 sublanes
    n_buf = 2                                     # BlockSpec double buffering
    per_pixel = (
        n_buf * (c_pad * itemsize + 32)           # logits + sublane-padded int32 targets
        + c_pad * (3 * 4 + itemsize)              # live temps: i32 iota, f32 x, f32 exp,
                                                  #   source-dtype where-select result
        + 256                                     # (1, TILE_P)-wide rows + slack
    )
    budget = int(vmem_bytes * 0.70)               # stays below vmem_limit_bytes (7/8)
    tile = max(128, min(budget // per_pixel, 512 * 1024))
    tile = (tile // 128) * 128
    hw_pad = ((hw + 127) // 128) * 128
    tile = min(tile, hw_pad)                      # never bigger than padded H*W
    # keep >= 2 total grid steps when possible so both v7x TensorCores get work
    if n_batch * ((hw + tile - 1) // tile) < 2 and hw > 128:
        half = (hw + 1) // 2
        tile = max(128, min(tile, ((half + 127) // 128) * 128))
    return int(tile)


@functools.partial(jax.jit, static_argnames=("ignore_index", "tile_p"))
def cross_entropy_loss_psp(logits_nchw, targets_nhw, ignore_index=IGNORE_INDEX,
                           tile_p=None):
    """Scalar mean cross-entropy over non-ignored pixels (reduction='mean')."""
    N, C, H, W = logits_nchw.shape
    HW = H * W

    # free reshapes only — no transpose, no padding copy, logits keep source dtype
    logits = logits_nchw.reshape(N, C, HW)
    targets = targets_nhw.reshape(N, 1, HW)
    if targets.dtype != jnp.int32:
        # TODO(synk): for uint8 targets, pass them through and upcast in-kernel to
        # skip this extra HBM pass (only matters for very small C).
        targets = targets.astype(jnp.int32)

    itemsize = jnp.dtype(logits_nchw.dtype).itemsize
    if tile_p is None:
        tile_p = _choose_tile_p(C, HW, itemsize, N, _VMEM_PER_CORE_BYTES)
    n_tiles = pl.cdiv(HW, tile_p)

    kernel = functools.partial(_ce_psp_kernel, hw=HW, tile_p=tile_p,
                               ignore_index=ignore_index)

    parts = pl.pallas_call(
        kernel,
        out_shape=jax.ShapeDtypeStruct((N, n_tiles, 2, 128), jnp.float32),
        grid_spec=pltpu.PrefetchScalarGridSpec(
            num_scalar_prefetch=0,
            grid=(N, n_tiles),
            in_specs=[
                pl.BlockSpec((1, C, tile_p), lambda n, j: (n, 0, j)),
                pl.BlockSpec((1, 1, tile_p), lambda n, j: (n, 0, j)),
            ],
            out_specs=pl.BlockSpec((1, 1, 2, 128), lambda n, j: (n, j, 0, 0)),
        ),
        compiler_params=pltpu.CompilerParams(
            dimension_semantics=("parallel", "parallel"),
            vmem_limit_bytes=int(_VMEM_PER_CORE_BYTES * 7 // 8),
        ),
    )(logits, targets)

    total = jnp.sum(parts[:, :, 0, 0])                      # f32 partial loss sums
    count = jnp.sum(parts[:, :, 1, 0].astype(jnp.int32))    # exact integer count
    return total / count.astype(jnp.float32)


def _reference_loss(logits_nchw, targets_nhw, ignore_index=IGNORE_INDEX):
    logp = jax.nn.log_softmax(logits_nchw.astype(jnp.float32), axis=1)
    logp = jnp.transpose(logp, (0, 2, 3, 1))
    valid = targets_nhw != ignore_index
    safe_t = jnp.where(valid, targets_nhw, 0).astype(jnp.int32)
    nll = -jnp.take_along_axis(logp, safe_t[..., None], axis=-1)[..., 0]
    return jnp.sum(jnp.where(valid, nll, 0.0)) / jnp.sum(valid)


if __name__ == "__main__":
    key = jax.random.PRNGKey(0)

    def run_case(k, n, c, h, w, dtype, tile_p=None):
        k1, k2, k3 = jax.random.split(k, 3)
        logits = jax.random.normal(k1, (n, c, h, w), dtype=jnp.float32).astype(dtype)
        targets = jax.random.randint(k2, (n, h, w), 0, c, dtype=jnp.int32)
        ignore_mask = jax.random.uniform(k3, (n, h, w)) < 0.1
        targets = jnp.where(ignore_mask, IGNORE_INDEX, targets)

        loss = cross_entropy_loss_psp(logits, targets, tile_p=tile_p)
        jax.block_until_ready(loss)

        ref = _reference_loss(logits, targets)
        assert loss.shape == ()
        assert jnp.allclose(loss, ref, atol=1e-4, rtol=1e-4), (float(loss), float(ref))

    k1, k2, k3, k4 = jax.random.split(key, 4)
    run_case(k1, 2, 4, 16, 16, jnp.float32)              # H*W a clean multiple of 128
    run_case(k2, 2, 4, 16, 17, jnp.float32)              # ragged tail (H*W % 128 != 0)
    run_case(k3, 2, 4, 16, 16, jnp.bfloat16)             # bf16 logits kept bf16 via DMA
    run_case(k4, 2, 4, 16, 17, jnp.float32, tile_p=128)  # forced multi-tile grid path

    print("KERNEL_OK")
</pallas_src>

<mosaic_0001>
module attributes {stable_mosaic.version = 11 : i64} {
  func.func @_ce_psp_kernel(%arg0: i32, %arg1: i32, %arg2: memref<1x4x256xf32, #tpu.memory_space<vmem>>, %arg3: memref<1x1x256xi32, #tpu.memory_space<vmem>>, %arg4: memref<1x1x2x128xf32, #tpu.memory_space<vmem>>) attributes {dimension_semantics = [#tpu.dimension_semantics<parallel>, #tpu.dimension_semantics<parallel>], iteration_bounds = array<i64: 2, 1>, scalar_prefetch = 0 : i64, scratch_operands = 0 : i64, tpu.core_type = #tpu.core_type<tc>, window_params = [{transform_indices = @transform_0, window_bounds = array<i64: 1, 4, 256>}, {transform_indices = @transform_1, window_bounds = array<i64: 1, 1, 256>}, {transform_indices = @transform_2, window_bounds = array<i64: 1, 1, 2, 128>}]} {
    %c0 = arith.constant 0 : index
    %c0_0 = arith.constant 0 : index
    %c0_1 = arith.constant 0 : index
    %0 = vector.load %arg2[%c0, %c0_0, %c0_1] : memref<1x4x256xf32, #tpu.memory_space<vmem>>, vector<1x4x256xf32>
    %1 = vector.shape_cast %0 : vector<1x4x256xf32> to vector<4x256xf32>
    %c0_2 = arith.constant 0 : index
    %c0_3 = arith.constant 0 : index
    %c0_4 = arith.constant 0 : index
    %2 = vector.load %arg3[%c0_2, %c0_3, %c0_4] : memref<1x1x256xi32, #tpu.memory_space<vmem>>, vector<1x1x256xi32>
    %3 = vector.shape_cast %2 : vector<1x1x256xi32> to vector<1x256xi32>
    %c256_i32 = arith.constant 256 : i32
    %4 = arith.muli %arg1, %c256_i32 : i32
    %5 = tpu.iota {dimensions = array<i32: 1>} : vector<1x256xi32>
    %6 = vector.broadcast %4 : i32 to vector<1x256xi32>
    %7 = arith.addi %6, %5 : vector<1x256xi32>
    %c256_i32_5 = arith.constant 256 : i32
    %8 = vector.broadcast %c256_i32_5 : i32 to vector<1x256xi32>
    %9 = arith.cmpi slt, %7, %8 : vector<1x256xi32>
    %c255_i32 = arith.constant 255 : i32
    %10 = vector.broadcast %c255_i32 : i32 to vector<1x256xi32>
    %11 = arith.cmpi ne, %3, %10 : vector<1x256xi32>
    %12 = arith.andi %9, %11 : vector<1x256xi1>
    %cst = arith.constant dense<0xFF800000> : vector<256xf32>
    %13 = vector.multi_reduction <maximumf>, %1, %cst [0] : vector<4x256xf32> to vector<256xf32>
    %14 = vector.shape_cast %13 : vector<256xf32> to vector<1x256xf32>
    %15 = vector.broadcast %14 : vector<1x256xf32> to vector<4x256xf32>
    %16 = arith.subf %1, %15 : vector<4x256xf32>
    %17 = math.exp %16 : vector<4x256xf32>
    %cst_6 = arith.constant dense<0.000000e+00> : vector<256xf32>
    %18 = vector.multi_reduction <add>, %17, %cst_6 [0] : vector<4x256xf32> to vector<256xf32>
    %19 = vector.shape_cast %18 : vector<256xf32> to vector<1x256xf32>
    %20 = math.log %19 : vector<1x256xf32>
    %21 = arith.addf %14, %20 : vector<1x256xf32>
    %22 = tpu.iota {dimensions = array<i32: 0>} : vector<4x256xi32>
    %23 = vector.broadcast %3 : vector<1x256xi32> to vector<4x256xi32>
    %24 = arith.cmpi eq, %22, %23 : vector<4x256xi32>
    %cst_7 = arith.constant 0.000000e+00 : f32
    %25 = vector.broadcast %cst_7 : f32 to vector<4x256xf32>
    %26 = arith.select %24, %1, %25 : vector<4x256xi1>, vector<4x256xf32>
    %cst_8 = arith.constant dense<0.000000e+00> : vector<256xf32>
    %27 = vector.multi_reduction <add>, %26, %cst_8 [0] : vector<4x256xf32> to vector<256xf32>
    %28 = vector.shape_cast %27 : vector<256xf32> to vector<1x256xf32>
    %29 = arith.subf %21, %28 : vector<1x256xf32>
    %cst_9 = arith.constant 0.000000e+00 : f32
    %30 = vector.broadcast %cst_9 : f32 to vector<1x256xf32>
    %31 = arith.select %12, %29, %30 : vector<1x256xi1>, vector<1x256xf32>
    %32 = arith.extui %12 : vector<1x256xi1> to vector<1x256xi32>
    %33 = arith.sitofp %32 : vector<1x256xi32> to vector<1x256xf32>
    %cst_10 = arith.constant dense<0.000000e+00> : vector<1xf32>
    %34 = vector.multi_reduction <add>, %31, %cst_10 [1] : vector<1x256xf32> to vector<1xf32>
    %35 = vector.shape_cast %34 : vector<1xf32> to vector<1x1xf32>
    %cst_11 = arith.constant dense<0.000000e+00> : vector<1xf32>
    %36 = vector.multi_reduction <add>, %33, %cst_11 [1] : vector<1x256xf32> to vector<1xf32>
    %37 = vector.shape_cast %36 : vector<1xf32> to vector<1x1xf32>
    %38 = tpu.iota {dimensions = array<i32: 0>} : vector<2x128xi32>
    %c0_i32 = arith.constant 0 : i32
    %39 = vector.broadcast %c0_i32 : i32 to vector<2x128xi32>
    %40 = arith.cmpi eq, %38, %39 : vector<2x128xi32>
    %41 = vector.shape_cast %35 : vector<1x1xf32> to vector<1x1xf32>
    %42 = vector.broadcast %41 : vector<1x1xf32> to vector<2x128xf32>
    %43 = vector.shape_cast %37 : vector<1x1xf32> to vector<1x1xf32>
    %44 = vector.broadcast %43 : vector<1x1xf32> to vector<2x128xf32>
    %45 = arith.select %40, %42, %44 : vector<2x128xi1>, vector<2x128xf32>
    %46 = vector.shape_cast %45 : vector<2x128xf32> to vector<1x1x2x128xf32>
    %c0_12 = arith.constant 0 : index
    %c0_13 = arith.constant 0 : index
    %c0_14 = arith.constant 0 : index
    %c0_15 = arith.constant 0 : index
    %47 = vector.load %arg4[%c0_12, %c0_13, %c0_14, %c0_15] : memref<1x1x2x128xf32, #tpu.memory_space<vmem>>, vector<1x1x2x128xf32>
    tpu.vector_store %arg4[%c0_12, %c0_13, %c0_14, %c0_15], %46 {strides = array<i32>} : memref<1x1x2x128xf32, #tpu.memory_space<vmem>>, vector<1x1x2x128xf32>,
    return
  }
  func.func @transform_0(%arg0: i32, %arg1: i32) -> (i32, i32, i32) {
    %c0_i32 = arith.constant 0 : i32
    %c0_i32_0 = arith.constant 0 : i32
    return %arg0, %c0_i32, %arg1 : i32, i32, i32
  }
  func.func @transform_1(%arg0: i32, %arg1: i32) -> (i32, i32, i32) {
    %c0_i32 = arith.constant 0 : i32
    %c0_i32_0 = arith.constant 0 : i32
    return %arg0, %c0_i32, %arg1 : i32, i32, i32
  }
  func.func @transform_2(%arg0: i32, %arg1: i32) -> (i32, i32, i32, i32) {
    %c0_i32 = arith.constant 0 : i32
    %c0_i32_0 = arith.constant 0 : i32
    %c0_i32_1 = arith.constant 0 : i32
    return %arg0, %arg1, %c0_i32, %c0_i32_0 : i32, i32, i32, i32
  }
}

</mosaic_0001>

<llo_original>
// kernel: cross_entropy_loss_psp.1
$region0: #{cross_entropy_loss_psp.1}
  #allocation0 [shape = 'u32[]', space=smem, size = 0x4, offset = 0x4, fixed_abs, tag = 'smem constant byte address 0x4 - core index']
  #allocation1 [shape = 'u32[144,128]{1,0:T(1,128)}', space=vmem, size = 0x12000, scoped, tag = 'internal scratch']
  %s0 = inlined_call_operand.vmem [shape: f32[2,4,256], index: 0, kind: input, shape index: {}]
  %s1 = inlined_call_operand.vmem [shape: s32[2,1,256], index: 1, kind: input, shape index: {}]
  %s2 = inlined_call_operand.vmem [shape: f32[2,1,2,128], index: 2, kind: output, shape index: {}]
  %s3 = sld [smem:[#allocation0]]
  $region41: #{cross_entropy_loss_psp.1} parent=0
    _
  %s5 = ssub.s32 1, %s3
  %s6 = scalar_select 0, %s5, %s3
  loop: start=0, step=1, limit=4
  $region2: #{cross_entropy_loss_psp.1} parent=0 // loop_pre_header
    _
  $region3: #{cross_entropy_loss_psp.1} parent=0 // loop_header
    %s8 = sphi 0, %s12
    %p9 = scmp.ge.s32.totalorder %s8, 4
    %s15 = sphi 0, %s27
    %s16 = sphi 0, %s23
    %s17 = sphi 0, %s15
    %s18 = sphi 0, %s16
    %s19 = sphi 0, %s17
    %s20 = sphi 0, %s18
    %s32 = sphi 0, %s34
    %s35 = sphi 0, %s32
    %s36 = sphi 0, %s35
    %s52 = sphi 0, %s36
    %s60 = sphi 0, %s62
    %s63 = sphi 0, %s60
    %s64 = sphi 0, %s63
    %s80 = sphi 0, %s64
    %s88 = sphi 0, %s90
    %s91 = sphi 0, %s88
    %s92 = sphi 0, %s91
    %s108 = sphi 0, %s92
  $region4: #{cross_entropy_loss_psp.1} parent=0 // loop_header_branch
    %11 = sbr.rel (%p9) target = $region8
  $region5: #{cross_entropy_loss_psp.1} parent=0 // loop_body
    %s13 = ssub.s32 %s8, 1
    %s14 = ssub.s32 %s8, 2
    %s21 = sadd.s32 1, %s16
    %p22 = scmp.ge.s32.totalorder %s21, 1
    %s23 = scalar_select %p22, 0, %s21
    %s24 = sadd.s32 1, %s15
    %s25 = scalar_select %p22, %s24, %s15
    %p26 = scmp.ge.s32.totalorder %s25, 2
    %s27 = scalar_select %p26, 0, %s25
    %s28 = ssub.s32 %s15, %s27
    %s29 = ssub.s32 %s16, %s23
    %s30 = sor.u32 %s28, %s29
    %p31 = scmp.eq.s32.totalorder %s30, 0
    %s33 = sadd.s32 %s32, 1
    %s34 = scalar_select %p31, %s32, %s33
    %p37 = pneg %p31
    %p38 = scmp.eq.s32.totalorder %s8, 1
    %p39 = por %p37, %p38
    %p40 = scmp.ne.s32.totalorder %s32, %s35
    %p41 = scmp.eq.s32.totalorder %s8, 0
    %p42 = por %p40, %p41
    %p43 = scmp.ne.s32.totalorder %s32, %s35
    %p44 = scmp.eq.s32.totalorder %s13, 1
    %p45 = por %p43, %p44
    %p46 = scmp.ne.s32.totalorder %s35, %s36
    %p47 = scmp.eq.s32.totalorder %s13, 0
    %p48 = por %p46, %p47
    %p49 = scmp.ne.s32.totalorder %s35, %s36
    %p50 = scmp.eq.s32.totalorder %s14, 1
    %p51 = por %p49, %p50
    %p53 = scmp.ne.s32.totalorder %s36, %s52
    %p54 = scmp.eq.s32.totalorder %s14, 0
    %p55 = por %p53, %p54
    %s56 = ssub.s32 %s15, %s27
    %s57 = ssub.s32 %s16, %s23
    %s58 = sor.u32 %s56, %s57
    %p59 = scmp.eq.s32.totalorder %s58, 0
    %s61 = sadd.s32 %s60, 1
    %s62 = scalar_select %p59, %s60, %s61
    %p65 = pneg %p59
    %p66 = scmp.eq.s32.totalorder %s8, 1
    %p67 = por %p65, %p66
    %p68 = scmp.ne.s32.totalorder %s60, %s63
    %p69 = scmp.eq.s32.totalorder %s8, 0
    %p70 = por %p68, %p69
    %p71 = scmp.ne.s32.totalorder %s60, %s63
    %p72 = scmp.eq.s32.totalorder %s13, 1
    %p73 = por %p71, %p72
    %p74 = scmp.ne.s32.totalorder %s63, %s64
    %p75 = scmp.eq.s32.totalorder %s13, 0
    %p76 = por %p74, %p75
    %p77 = scmp.ne.s32.totalorder %s63, %s64
    %p78 = scmp.eq.s32.totalorder %s14, 1
    %p79 = por %p77, %p78
    %p81 = scmp.ne.s32.totalorder %s64, %s80
    %p82 = scmp.eq.s32.totalorder %s14, 0
    %p83 = por %p81, %p82
    %s84 = ssub.s32 %s15, %s27
    %s85 = ssub.s32 %s16, %s23
    %s86 = sor.u32 %s84, %s85
    %p87 = scmp.eq.s32.totalorder %s86, 0
    %s89 = sadd.s32 %s88, 1
    %s90 = scalar_select %p87, %s88, %s89
    %p93 = pneg %p87
    %p94 = scmp.eq.s32.totalorder %s8, 1
    %p95 = por %p93, %p94
    %p96 = scmp.ne.s32.totalorder %s88, %s91
    %p97 = scmp.eq.s32.totalorder %s8, 0
    %p98 = por %p96, %p97
    %p99 = scmp.ne.s32.totalorder %s88, %s91
    %p100 = scmp.eq.s32.totalorder %s13, 1
    %p101 = por %p99, %p100
    %p102 = scmp.ne.s32.totalorder %s91, %s92
    %p103 = scmp.eq.s32.totalorder %s13, 0
    %p104 = por %p102, %p103
    %p105 = scmp.ne.s32.totalorder %s91, %s92
    %p106 = scmp.eq.s32.totalorder %s14, 1
    %p107 = por %p105, %p106
    %p109 = scmp.ne.s32.totalorder %s92, %s108
    %p110 = scmp.eq.s32.totalorder %s14, 0
    %p111 = por %p109, %p110
    %p112 = scmp.le.s32.totalorder 1, %s8
    %p113 = scmp.lt.s32.totalorder %s8, 3
    %p114 = pnand %p112, %p113
    %p115 = pneg %p114
    // Predicated region
    $region9: #{cross_entropy_loss_psp.1} parent=5 // pred_check
      _
    $region10: #{cross_entropy_loss_psp.1} parent=5 // pred_check_branch
      %117 = sbr.rel (%p114) target = $region12
    $region11: #{cross_entropy_loss_psp.1} parent=5 // pred_region
      %s118 = ssub.s32 %s8, 1
    $region12: #{cross_entropy_loss_psp.1} parent=5 // pred_fallthru
      _
    %p119 = scmp.lt.s32.totalorder %s8, 2
    // Predicated region
    $region13: #{cross_entropy_loss_psp.1} parent=5 // pred_check
      %p120 = pneg %p119
    $region14: #{cross_entropy_loss_psp.1} parent=5 // pred_check_branch
      %122 = sbr.rel (%p120) target = $region16
    $region15: #{cross_entropy_loss_psp.1} parent=5 // pred_region
      // Predicated region
      $region17: #{cross_entropy_loss_psp.1} parent=15 // pred_check
        %p123 = pneg %p42
      $region18: #{cross_entropy_loss_psp.1} parent=15 // pred_check_branch
        %125 = sbr.rel (%p123) target = $region20
      $region19: #{cross_entropy_loss_psp.1} parent=15 // pred_region
        %s126 = smul.u32 2, %s16
        %p127 = scmp.lt.s32.totalorder %s15, 1
        %s128 = scalar_select %p127, %s15, 1
        %p129 = scmp.lt.s32.totalorder %s126, 1
        %s130 = scalar_select %p129, %s126, 1
        %s131 = smul.addr %s128, 2
        %s132 = sadd.s32 %s130, %s131
        %s133 = smul.addr %s132, 4
        %s134 = scalar_lea.vmem %s0, %s133
        %s135 = smul.u32 2, %s16
      $region20: #{cross_entropy_loss_psp.1} parent=15 // pred_fallthru
        _
      // Predicated region
      $region21: #{cross_entropy_loss_psp.1} parent=15 // pred_check
        %p136 = pneg %p70
      $region22: #{cross_entropy_loss_psp.1} parent=15 // pred_check_branch
        %138 = sbr.rel (%p136) target = $region24
      $region23: #{cross_entropy_loss_psp.1} parent=15 // pred_region
        %s139 = smul.u32 2, %s16
        %p140 = scmp.lt.s32.totalorder %s15, 1
        %s141 = scalar_select %p140, %s15, 1
        %p142 = scmp.lt.s32.totalorder %s139, 1
        %s143 = scalar_select %p142, %s139, 1
        %s144 = smul.addr %s141, 2
        %s145 = sadd.s32 %s143, %s144
        %s146 = scalar_lea.vmem %s1, %s145
        %s147 = smul.u32 2, %s16
      $region24: #{cross_entropy_loss_psp.1} parent=15 // pred_fallthru
        _
    $region16: #{cross_entropy_loss_psp.1} parent=5 // pred_fallthru
      _
    %p148 = scmp.le.s32.totalorder 1, %s8
    %p149 = scmp.lt.s32.totalorder %s8, 3
    %p150 = pnand %p148, %p149
    %p151 = pneg %p150
    // Predicated region
    $region25: #{cross_entropy_loss_psp.1} parent=5 // pred_check
      _
    $region26: #{cross_entropy_loss_psp.1} parent=5 // pred_check_branch
      %153 = sbr.rel (%p150) target = $region28
    $region27: #{cross_entropy_loss_psp.1} parent=5 // pred_region
      %s154 = ssub.s32 %s8, 1
      %s155 = smul.u32 2, %s18
      %p156 = scmp.lt.s32.totalorder %s17, 1
      %s157 = scalar_select %p156, %s17, 1
      %p158 = scmp.lt.s32.totalorder %s155, 1
      %s159 = scalar_select %p158, %s155, 1
      %s160 = smul.addr %s157, 2
      %s161 = sadd.s32 %s159, %s160
      %s162 = smul.addr %s161, 4
      %s163 = scalar_lea.vmem %s0, %s162
      %p164 = pneg %p48
      %p165 = pneg %p45
      %s166 = smul.u32 2, %s18
      %p167 = scmp.lt.s32.totalorder %s17, 1
      %s168 = scalar_select %p167, %s17, 1
      %p169 = scmp.lt.s32.totalorder %s166, 1
      %s170 = scalar_select %p169, %s166, 1
      %s171 = smul.addr %s168, 2
      %s172 = sadd.s32 %s170, %s171
      %s173 = scalar_lea.vmem %s1, %s172
      %p174 = pneg %p76
      %p175 = pneg %p73
      %p176 = pneg %p104
      %p177 = pneg %p101
      %p178 = scmp.lt.s32.totalorder %s17, 1
      %s179 = scalar_select %p178, %s17, 1
      %p180 = scmp.lt.s32.totalorder %s18, 0
      %s181 = scalar_select %p180, %s18, 0
      %s182 = sadd.s32 %s181, %s179
      %s183 = smul.addr %s182, 2
      %s184 = scalar_lea.vmem %s2, %s183
      %s185 = smul.u32 2, %s18
      %p186 = scmp.lt.s32.totalorder %s17, 1
      %s187 = scalar_select %p186, %s17, 1
      %p188 = scmp.lt.s32.totalorder %s185, 1
      %s189 = scalar_select %p188, %s185, 1
      %s190 = smul.addr %s187, 2
      %s191 = sadd.s32 %s189, %s190
      %s192 = smul.addr %s191, 4
      %s193 = scalar_lea.vmem %s0, %s192
      %s194 = smul.u32 2, %s18
      %s195 = smul.u32 2, %s18
      %p196 = scmp.lt.s32.totalorder %s17, 1
      %s197 = scalar_select %p196, %s17, 1
      %p198 = scmp.lt.s32.totalorder %s195, 1
      %s199 = scalar_select %p198, %s195, 1
      %s200 = smul.addr %s197, 2
      %s201 = sadd.s32 %s199, %s200
      %s202 = scalar_lea.vmem %s1, %s201
      %s203 = smul.u32 2, %s18
      %p204 = scmp.lt.s32.totalorder %s17, 1
      %s205 = scalar_select %p204, %s17, 1
      %p206 = scmp.lt.s32.totalorder %s18, 0
      %s207 = scalar_select %p206, %s18, 0
      %s208 = sadd.s32 %s207, %s205
      %s209 = smul.addr %s208, 2
      %s210 = scalar_lea.vmem %s2, %s209
      %v211 = vld [vmem:[%s193] sm:$0xff]
      %v212 = vld [vmem:[%s202] sm:$0x3]
      %s213 = smul.u32 %s18, 256
      %v214 = vlaneseq
      %v215 = vand.u32 %v214, 127
      %v216 = vadd.s32 %v215, 128
      %v217 = vstv %s213
      %v218 = vadd.s32 %v217, %v215
      %v219 = vadd.s32 %v217, %v216
      %vm220 = vcmp.lt.s32.totalorder %v218, 256
      %vm221 = vcmp.lt.s32.totalorder %v219, 256
      %vm222 = vcmp.ne.s32.totalorder %v212, 255
      %v223 = vsel %vm222, 1, 0
      %v224 = vlaneseq
      %v225 = vshrl.u32 %v224, 7
      %v226 = vsub.s32 0, %v225
      %v227 = vrot.slane %v223, %v226
      %v228 = vlaneseq
      %v229 = vshrl.u32 %v228, 7
      %v230 = vsub.s32 1, %v229
      %v231 = vrot.slane %v223, %v230
      %vm232 = vcmp.ne.s32.totalorder %v227, 0
      %vm233 = vcmp.ne.s32.totalorder %v231, 0
      %vm234 = vmand %vm220, %vm232
      %vm235 = vmand %vm221, %vm233
      %v237 = vcombine.high %v211, %v211
      %vm239 = vcmask 1043456
      %v240 = vsel %vm239, %v211, -inf
      %v241 = vrot.slane %v240, 4
      %v242 = vmax.f32 %v240, %v241
      %v243 = vrot.slane %v242, 2
      %v244 = vmax.f32 %v242, %v243
      %v245 = vrot.slane %v244, 1
      %v246 = vmax.f32 %v244, %v245
      %v247 = vsel %vm239, %v237, -inf
      %v248 = vrot.slane %v247, 4
      %v249 = vmax.f32 %v247, %v248
      %v250 = vrot.slane %v249, 2
      %v251 = vmax.f32 %v249, %v250
      %v252 = vrot.slane %v251, 1
      %v253 = vmax.f32 %v251, %v252
      %v256 = vcombine.low %v246, %v253
      %v258 = vsub.f32 %v211, %v256
      %v259 = vmul.f32 %v258, 1.442695
      %v260 = vpow.pop %v259
      %v262 = vcombine.high %v260, %v260
      %v264 = vsel %vm239, %v260, 0.0
      %v265 = vrot.slane %v264, 4
      %v266 = vadd.f32 %v264, %v265
      %v267 = vrot.slane %v266, 2
      %v268 = vadd.f32 %v266, %v267
      %v269 = vrot.slane %v268, 1
      %v270 = vadd.f32 %v268, %v269
      %v271 = vsel %vm239, %v262, 0.0
      %v272 = vrot.slane %v271, 4
      %v273 = vadd.f32 %v271, %v272
      %v274 = vrot.slane %v273, 2
      %v275 = vadd.f32 %v273, %v274
      %v276 = vrot.slane %v275, 1
      %v277 = vadd.f32 %v275, %v276
      %v278 = vlog2.pop %v270
      %v279 = vmul.f32 %v278, 0.6931472
      %v280 = vlog2.pop %v277
      %v281 = vmul.f32 %v280, 0.6931472
      %v282 = vadd.f32 %v246, %v279
      %v283 = vadd.f32 %v253, %v281
      %v284 = vlaneseq
      %v285 = vshrl.u32 %v284, 7
      %v286 = vlaneseq
      %v287 = vshrl.u32 %v286, 7
      %v288 = vsub.s32 0, %v287
      %v289 = vrot.slane %v212, %v288
      %v290 = vlaneseq
      %v291 = vshrl.u32 %v290, 7
      %v292 = vsub.s32 1, %v291
      %v293 = vrot.slane %v212, %v292
      %vm294 = vcmp.eq.s32.totalorder %v285, %v289
      %vm295 = vcmp.eq.s32.totalorder %v285, %v293
      %v296 = vsel %vm294, %v211, 0.0
      %v297 = vsel %vm295, %v237, 0.0
      %v298 = vsel %vm239, %v296, 0.0
      %v299 = vrot.slane %v298, 4
      %v300 = vadd.f32 %v298, %v299
      %v301 = vrot.slane %v300, 2
      %v302 = vadd.f32 %v300, %v301
      %v303 = vrot.slane %v302, 1
      %v304 = vadd.f32 %v302, %v303
      %v305 = vsel %vm239, %v297, 0.0
      %v306 = vrot.slane %v305, 4
      %v307 = vadd.f32 %v305, %v306
      %v308 = vrot.slane %v307, 2
      %v309 = vadd.f32 %v307, %v308
      %v310 = vrot.slane %v309, 1
      %v311 = vadd.f32 %v309, %v310
      %v312 = vsub.f32 %v282, %v304
      %v313 = vsub.f32 %v283, %v311
      %v314 = vsel %vm234, %v312, 0.0
      %v315 = vsel %vm235, %v313, 0.0
      %v316 = vsel %vm234, 1, 0
      %v317 = vsel %vm235, 1, 0
      %v318 = vcvt.s32.f32 %v316
      %v319 = vcvt.s32.f32 %v317
      %vm320 = vcmask 1040384
      %v321 = vsel %vm320, %v314, 0.0
      %v322 = vsel %vm320, %v315, 0.0
      %v323 = vadd.f32 %v321, %v322
      %324 = vadd.xlane.f32.xlu0 %v323
      %v325 = vpop.xlane.xlu0 %324
      %v326 = vsel %vm320, %v318, 0.0
      %v327 = vsel %vm320, %v319, 0.0
      %v328 = vadd.f32 %v326, %v327
      %329 = vadd.xlane.f32.xlu0 %v328
      %v330 = vpop.xlane.xlu0 %329
      %vm331 = vcmp.eq.s32.totalorder %v285, 0
      %v332 = vlaneseq
      %v333 = vshrl.u32 %v332, 7
      %v334 = vsub.s32 0, %v333
      %v335 = vrot.slane %v325, %v334
      %v336 = vlaneseq
      %v337 = vshrl.u32 %v336, 7
      %v338 = vsub.s32 0, %v337
      %v339 = vrot.slane %v330, %v338
      %v340 = vsel %vm331, %v335, %v339
      %341 = vst [vmem:[%s210] sm:$0x3] %v340
      %p342 = scmp.lt.s32.totalorder %s17, 1
      %s343 = scalar_select %p342, %s17, 1
      %p344 = scmp.lt.s32.totalorder %s18, 0
      %s345 = scalar_select %p344, %s18, 0
      %s346 = sadd.s32 %s345, %s343
      %s347 = smul.addr %s346, 2
      %s348 = scalar_lea.vmem %s2, %s347
      // Predicated region
      $region29: #{cross_entropy_loss_psp.1} parent=27 // pred_check
        %p349 = pneg %p101
      $region30: #{cross_entropy_loss_psp.1} parent=27 // pred_check_branch
        %351 = sbr.rel (%p349) target = $region32
      $region31: #{cross_entropy_loss_psp.1} parent=27 // pred_region
        _
      $region32: #{cross_entropy_loss_psp.1} parent=27 // pred_fallthru
        _
    $region28: #{cross_entropy_loss_psp.1} parent=5 // pred_fallthru
      _
    %p352 = scmp.le.s32.totalorder 2, %s8
    // Predicated region
    $region33: #{cross_entropy_loss_psp.1} parent=5 // pred_check
      %p353 = pneg %p352
    $region34: #{cross_entropy_loss_psp.1} parent=5 // pred_check_branch
      %355 = sbr.rel (%p353) target = $region36
    $region35: #{cross_entropy_loss_psp.1} parent=5 // pred_region
      %s356 = ssub.s32 %s8, 2
      // Predicated region
      $region37: #{cross_entropy_loss_psp.1} parent=35 // pred_check
        %p357 = pneg %p107
      $region38: #{cross_entropy_loss_psp.1} parent=35 // pred_check_branch
        %359 = sbr.rel (%p357) target = $region40
      $region39: #{cross_entropy_loss_psp.1} parent=35 // pred_region
        %p360 = scmp.lt.s32.totalorder %s19, 1
        %s361 = scalar_select %p360, %s19, 1
        %p362 = scmp.lt.s32.totalorder %s20, 0
        %s363 = scalar_select %p362, %s20, 0
        %s364 = sadd.s32 %s363, %s361
        %s365 = smul.addr %s364, 2
        %s366 = scalar_lea.vmem %s2, %s365
      $region40: #{cross_entropy_loss_psp.1} parent=35 // pred_fallthru
        _
    $region36: #{cross_entropy_loss_psp.1} parent=5 // pred_fallthru
      _
  $region6: #{cross_entropy_loss_psp.1} parent=0 // loop_footer
    %s12 = sadd.s32 1, %s8
  $region7: #{cross_entropy_loss_psp.1} parent=0 // loop_footer_branch
    %7 = sbr.rel target = $region3
  $region8: #{cross_entropy_loss_psp.1} parent=0 // loop_exit
    _

</llo_original>
